<compile_context>
chip_gen: v5e
topology: v5e:2x2
jax: 0.10.0
libtpu: 0.0.40
codegen_flags: <defaults>
</compile_context>

<pallas_src>
import jax
import jax.numpy as jnp
from jax.experimental import pallas as pl
from jax.experimental.pallas import tpu as pltpu


def _vrl_kernel(scal_ref, vu_ref, vi_ref, wu_ref, wi_ref, ou_ref, oi_ref):
    # scal_ref (SMEM, f32[4]) = [c_user, cb_user, c_item, cb_item]
    def branch(v_ref, w_ref, o_ref, c, cb):
        v = v_ref[...]                                    # (TB, L)  f32
        logits = v * c + cb                               # (TB, L); cb cancels in softmax
        m = jnp.max(logits, axis=1, keepdims=True)        # (TB, 1)
        e = jnp.exp(logits - m)                           # (TB, L)
        denom = jnp.sum(e, axis=1, keepdims=True)         # (TB, 1)
        # sum_l v*scores = (sum_l v*e) / (sum_l e): one exact divide per row.
        s = jnp.sum(v * e, axis=1, keepdims=True) / denom  # (TB, 1)
        o_ref[...] = (s * w_ref[...]).astype(o_ref.dtype)  # (TB, D) store, full-D lanes

    branch(vu_ref, wu_ref, ou_ref, scal_ref[0], scal_ref[1])
    branch(vi_ref, wi_ref, oi_ref, scal_ref[2], scal_ref[3])


def _choose_batch_tile(B, L, D, vmem_budget_bytes, max_tb=None):
    # Per grid step VMEM ~= 2 (double-buffer) * 2 (branches) * TB * (L + D) * 4 B.
    per_row_bytes = 2 * 2 * (L + D) * 4
    cap = max(8, vmem_budget_bytes // per_row_bytes)
    tb = min(B, 1024, cap)
    if max_tb is not None:
        tb = min(tb, max_tb)
    if tb >= B:
        return B                       # single tile; block dim == full B is always legal
    return max(8, (tb // 8) * 8)       # partial tiles must be f32-sublane aligned


def vanra_vrl_forward(batch_userVis, batch_itemVis, params, *,
                      max_tb=None, vmem_budget_bytes=24 << 20):
    """Fused VANRA_VRL forward: both LocalAttention branches in one pallas_call."""
    B, L = batch_userVis.shape
    D = params["wedProj_user"].shape[1]

    vu = batch_userVis.astype(jnp.float32)                    # (B, L)
    vi = batch_itemVis.astype(jnp.float32)                    # (B, L)
    wu = params["wedProj_user"].astype(jnp.float32)           # (1, D)
    wi = params["wedProj_item"].astype(jnp.float32)           # (1, D)

    # Hoisted rank-1 collapse of the (1, D) conv: c = <wedProj, conv_w>.
    c_u = jnp.sum(wu * params["conv_w_user"].astype(jnp.float32))
    c_i = jnp.sum(wi * params["conv_w_item"].astype(jnp.float32))
    cb_u = params["conv_b_user"].astype(jnp.float32).reshape(())
    cb_i = params["conv_b_item"].astype(jnp.float32).reshape(())
    scal = jnp.stack([c_u, cb_u, c_i, cb_i])                  # (4,) -> SMEM

    TB = _choose_batch_tile(B, L, D, vmem_budget_bytes, max_tb)
    grid = (pl.cdiv(B, TB),)

    out_user, out_item = pl.pallas_call(
        _vrl_kernel,
        out_shape=(jax.ShapeDtypeStruct((B, D), jnp.float32),
                   jax.ShapeDtypeStruct((B, D), jnp.float32)),
        grid=grid,
        in_specs=[
            pl.BlockSpec(memory_space=pltpu.MemorySpace.SMEM),  # scal (4,)
            pl.BlockSpec((TB, L), lambda i: (i, 0)),            # user vis tile
            pl.BlockSpec((TB, L), lambda i: (i, 0)),            # item vis tile
            pl.BlockSpec((1, D), lambda i: (0, 0)),             # wedProj_user
            pl.BlockSpec((1, D), lambda i: (0, 0)),             # wedProj_item
        ],
        out_specs=(pl.BlockSpec((TB, D), lambda i: (i, 0)),
                   pl.BlockSpec((TB, D), lambda i: (i, 0))),
        compiler_params=pltpu.CompilerParams(
            dimension_semantics=("parallel",),
            vmem_limit_bytes=48 << 20),
    )(scal, vu, vi, wu, wi)

    return out_user, out_item


def _reference_branch(v, w, cw, cb):
    # Pure-JAX reference with the original (un-collapsed) math.
    x = v[:, :, None] * w[0][None, None, :]
    logits = jnp.sum(x * cw[0][None, None, :], axis=2) + cb[0]
    scores = jax.nn.softmax(logits, axis=1)
    return jnp.sum(x * scores[:, :, None], axis=1)


def init_params(key, output_size):
    """Deterministic parameter init matching the module's __init__ shapes."""
    D = output_size
    ks = jax.random.split(key, 6)
    # wedProj_*: uniform(-0.01, 0.01), shape (1, D)
    # Conv2d(1,1,(1,D)) default init: uniform(+-1/sqrt(fan_in)), fan_in = 1*1*D
    bound = 1.0 / float(jnp.sqrt(jnp.float32(D)))
    return {
        "wedProj_user": jax.random.uniform(ks[0], (1, D), jnp.float32, -0.01, 0.01),
        "wedProj_item": jax.random.uniform(ks[1], (1, D), jnp.float32, -0.01, 0.01),
        "conv_w_user": jax.random.uniform(ks[2], (1, D), jnp.float32, -bound, bound),
        "conv_b_user": jax.random.uniform(ks[3], (1,), jnp.float32, -bound, bound),
        "conv_w_item": jax.random.uniform(ks[4], (1, D), jnp.float32, -bound, bound),
        "conv_b_item": jax.random.uniform(ks[5], (1,), jnp.float32, -bound, bound),
    }


if __name__ == "__main__":
    key = jax.random.PRNGKey(0)
    k_in, k_p, k_in2 = jax.random.split(key, 3)

    # Small shapes consistent with the module: bsz=2, max_vis_len=8, output_size=32.
    B, L, D = 2, 8, 32
    ku, ki = jax.random.split(k_in)
    batch_userVis = jax.random.normal(ku, (B, L), jnp.float32)
    batch_itemVis = jax.random.normal(ki, (B, L), jnp.float32)
    params = init_params(k_p, D)

    out_user, out_item = vanra_vrl_forward(batch_userVis, batch_itemVis, params)
    jax.block_until_ready((out_user, out_item))

    ref_user = _reference_branch(batch_userVis, params["wedProj_user"],
                                 params["conv_w_user"], params["conv_b_user"])
    ref_item = _reference_branch(batch_itemVis, params["wedProj_item"],
                                 params["conv_w_item"], params["conv_b_item"])
    assert out_user.shape == (B, D) and out_item.shape == (B, D)
    assert jnp.allclose(out_user, ref_user, rtol=1e-5, atol=1e-7)
    assert jnp.allclose(out_item, ref_item, rtol=1e-5, atol=1e-7)

    # Exercise the remainder-safe tiling path: B not divisible by the forced tile.
    B2 = 20
    ku2, ki2 = jax.random.split(k_in2)
    u2 = jax.random.normal(ku2, (B2, L), jnp.float32)
    i2 = jax.random.normal(ki2, (B2, L), jnp.float32)
    o_u2, o_i2 = vanra_vrl_forward(u2, i2, params, max_tb=8)
    jax.block_until_ready((o_u2, o_i2))
    r_u2 = _reference_branch(u2, params["wedProj_user"],
                             params["conv_w_user"], params["conv_b_user"])
    r_i2 = _reference_branch(i2, params["wedProj_item"],
                             params["conv_w_item"], params["conv_b_item"])
    assert jnp.allclose(o_u2, r_u2, rtol=1e-5, atol=1e-7)
    assert jnp.allclose(o_i2, r_i2, rtol=1e-5, atol=1e-7)

    print("KERNEL_OK")
</pallas_src>

<mosaic_0001>
module attributes {stable_mosaic.version = 11 : i64} {
  func.func @_vrl_kernel(%arg0: i32, %arg1: memref<4xf32, #tpu.memory_space<smem>>, %arg2: memref<2x8xf32, #tpu.memory_space<vmem>>, %arg3: memref<2x8xf32, #tpu.memory_space<vmem>>, %arg4: memref<1x32xf32, #tpu.memory_space<vmem>>, %arg5: memref<1x32xf32, #tpu.memory_space<vmem>>, %arg6: memref<2x32xf32, #tpu.memory_space<vmem>>, %arg7: memref<2x32xf32, #tpu.memory_space<vmem>>) attributes {dimension_semantics = [#tpu.dimension_semantics<parallel>], iteration_bounds = array<i64: 1>, scalar_prefetch = 0 : i64, scratch_operands = 0 : i64, tpu.core_type = #tpu.core_type<tc>, window_params = [{transform_indices = @transform_0, window_bounds = array<i64: 4>}, {transform_indices = @transform_1, window_bounds = array<i64: 2, 8>}, {transform_indices = @transform_2, window_bounds = array<i64: 2, 8>}, {pipeline_mode = #tpu.pipeline_mode<synchronous>, transform_indices = @transform_3, window_bounds = array<i64: 1, 32>}, {pipeline_mode = #tpu.pipeline_mode<synchronous>, transform_indices = @transform_4, window_bounds = array<i64: 1, 32>}, {transform_indices = @transform_5, window_bounds = array<i64: 2, 32>}, {transform_indices = @transform_6, window_bounds = array<i64: 2, 32>}]} {
    %c0 = arith.constant 0 : index
    %0 = memref.load %arg1[%c0] : memref<4xf32, #tpu.memory_space<smem>>
    %c1 = arith.constant 1 : index
    %1 = memref.load %arg1[%c1] : memref<4xf32, #tpu.memory_space<smem>>
    %c0_0 = arith.constant 0 : index
    %c0_1 = arith.constant 0 : index
    %2 = vector.load %arg2[%c0_0, %c0_1] : memref<2x8xf32, #tpu.memory_space<vmem>>, vector<2x8xf32>
    %3 = vector.broadcast %0 : f32 to vector<2x8xf32>
    %4 = arith.mulf %2, %3 : vector<2x8xf32>
    %5 = vector.broadcast %1 : f32 to vector<2x8xf32>
    %6 = arith.addf %4, %5 : vector<2x8xf32>
    %cst = arith.constant dense<0xFF800000> : vector<2xf32>
    %7 = vector.multi_reduction <maximumf>, %6, %cst [1] : vector<2x8xf32> to vector<2xf32>
    %8 = vector.shape_cast %7 : vector<2xf32> to vector<2x1xf32>
    %9 = vector.broadcast %8 : vector<2x1xf32> to vector<2x8xf32>
    %10 = arith.subf %6, %9 : vector<2x8xf32>
    %11 = math.exp %10 : vector<2x8xf32>
    %cst_2 = arith.constant dense<0.000000e+00> : vector<2xf32>
    %12 = vector.multi_reduction <add>, %11, %cst_2 [1] : vector<2x8xf32> to vector<2xf32>
    %13 = vector.shape_cast %12 : vector<2xf32> to vector<2x1xf32>
    %14 = arith.mulf %2, %11 : vector<2x8xf32>
    %cst_3 = arith.constant dense<0.000000e+00> : vector<2xf32>
    %15 = vector.multi_reduction <add>, %14, %cst_3 [1] : vector<2x8xf32> to vector<2xf32>
    %16 = vector.shape_cast %15 : vector<2xf32> to vector<2x1xf32>
    %17 = arith.divf %16, %13 : vector<2x1xf32>
    %c0_4 = arith.constant 0 : index
    %c0_5 = arith.constant 0 : index
    %18 = vector.load %arg4[%c0_4, %c0_5] : memref<1x32xf32, #tpu.memory_space<vmem>>, vector<1x32xf32>
    %19 = vector.broadcast %17 : vector<2x1xf32> to vector<2x32xf32>
    %20 = vector.broadcast %18 : vector<1x32xf32> to vector<2x32xf32>
    %21 = arith.mulf %19, %20 : vector<2x32xf32>
    %c0_6 = arith.constant 0 : index
    %c0_7 = arith.constant 0 : index
    %22 = vector.load %arg6[%c0_6, %c0_7] : memref<2x32xf32, #tpu.memory_space<vmem>>, vector<2x32xf32>
    tpu.vector_store %arg6[%c0_6, %c0_7], %21 {strides = array<i32>} : memref<2x32xf32, #tpu.memory_space<vmem>>, vector<2x32xf32>,
    %c2 = arith.constant 2 : index
    %23 = memref.load %arg1[%c2] : memref<4xf32, #tpu.memory_space<smem>>
    %c3 = arith.constant 3 : index
    %24 = memref.load %arg1[%c3] : memref<4xf32, #tpu.memory_space<smem>>
    %c0_8 = arith.constant 0 : index
    %c0_9 = arith.constant 0 : index
    %25 = vector.load %arg3[%c0_8, %c0_9] : memref<2x8xf32, #tpu.memory_space<vmem>>, vector<2x8xf32>
    %26 = vector.broadcast %23 : f32 to vector<2x8xf32>
    %27 = arith.mulf %25, %26 : vector<2x8xf32>
    %28 = vector.broadcast %24 : f32 to vector<2x8xf32>
    %29 = arith.addf %27, %28 : vector<2x8xf32>
    %cst_10 = arith.constant dense<0xFF800000> : vector<2xf32>
    %30 = vector.multi_reduction <maximumf>, %29, %cst_10 [1] : vector<2x8xf32> to vector<2xf32>
    %31 = vector.shape_cast %30 : vector<2xf32> to vector<2x1xf32>
    %32 = vector.broadcast %31 : vector<2x1xf32> to vector<2x8xf32>
    %33 = arith.subf %29, %32 : vector<2x8xf32>
    %34 = math.exp %33 : vector<2x8xf32>
    %cst_11 = arith.constant dense<0.000000e+00> : vector<2xf32>
    %35 = vector.multi_reduction <add>, %34, %cst_11 [1] : vector<2x8xf32> to vector<2xf32>
    %36 = vector.shape_cast %35 : vector<2xf32> to vector<2x1xf32>
    %37 = arith.mulf %25, %34 : vector<2x8xf32>
    %cst_12 = arith.constant dense<0.000000e+00> : vector<2xf32>
    %38 = vector.multi_reduction <add>, %37, %cst_12 [1] : vector<2x8xf32> to vector<2xf32>
    %39 = vector.shape_cast %38 : vector<2xf32> to vector<2x1xf32>
    %40 = arith.divf %39, %36 : vector<2x1xf32>
    %c0_13 = arith.constant 0 : index
    %c0_14 = arith.constant 0 : index
    %41 = vector.load %arg5[%c0_13, %c0_14] : memref<1x32xf32, #tpu.memory_space<vmem>>, vector<1x32xf32>
    %42 = vector.broadcast %40 : vector<2x1xf32> to vector<2x32xf32>
    %43 = vector.broadcast %41 : vector<1x32xf32> to vector<2x32xf32>
    %44 = arith.mulf %42, %43 : vector<2x32xf32>
    %c0_15 = arith.constant 0 : index
    %c0_16 = arith.constant 0 : index
    %45 = vector.load %arg7[%c0_15, %c0_16] : memref<2x32xf32, #tpu.memory_space<vmem>>, vector<2x32xf32>
    tpu.vector_store %arg7[%c0_15, %c0_16], %44 {strides = array<i32>} : memref<2x32xf32, #tpu.memory_space<vmem>>, vector<2x32xf32>,
    return
  }
  func.func @transform_0(%arg0: i32) -> i32 {
    %c0_i32 = arith.constant 0 : i32
    %c0_i32_0 = arith.constant 0 : i32
    return %c0_i32 : i32
  }
  func.func @transform_1(%arg0: i32) -> (i32, i32) {
    %c0_i32 = arith.constant 0 : i32
    %c0_i32_0 = arith.constant 0 : i32
    return %arg0, %c0_i32 : i32, i32
  }
  func.func @transform_2(%arg0: i32) -> (i32, i32) {
    %c0_i32 = arith.constant 0 : i32
    %c0_i32_0 = arith.constant 0 : i32
    return %arg0, %c0_i32 : i32, i32
  }
  func.func @transform_3(%arg0: i32) -> (i32, i32) {
    %c0_i32 = arith.constant 0 : i32
    %c0_i32_0 = arith.constant 0 : i32
    %c0_i32_1 = arith.constant 0 : i32
    return %c0_i32, %c0_i32_0 : i32, i32
  }
  func.func @transform_4(%arg0: i32) -> (i32, i32) {
    %c0_i32 = arith.constant 0 : i32
    %c0_i32_0 = arith.constant 0 : i32
    %c0_i32_1 = arith.constant 0 : i32
    return %c0_i32, %c0_i32_0 : i32, i32
  }
  func.func @transform_5(%arg0: i32) -> (i32, i32) {
    %c0_i32 = arith.constant 0 : i32
    %c0_i32_0 = arith.constant 0 : i32
    return %arg0, %c0_i32 : i32, i32
  }
  func.func @transform_6(%arg0: i32) -> (i32, i32) {
    %c0_i32 = arith.constant 0 : i32
    %c0_i32_0 = arith.constant 0 : i32
    return %arg0, %c0_i32 : i32, i32
  }
}

</mosaic_0001>

<llo_original>
// kernel: tpu_custom_call.1
$region0: #{tpu_custom_call.1}
  #allocation0 [shape = 'u32[]', space=smem, size = 0x4, offset = 0x4, fixed_abs, tag = 'smem constant byte address 0x4 - core index']
  #allocation1 [shape = 'u32[72,128]{1,0:T(1,128)}', space=vmem, size = 0x9000, scoped, tag = 'internal scratch']
  %s0 = inlined_call_operand.hbm [shape: f32[4], index: 0, kind: input, shape index: {}]
  %s1 = inlined_call_operand.hbm [shape: f32[2,8], index: 1, kind: input, shape index: {}]
  %s2 = inlined_call_operand.hbm [shape: f32[2,8], index: 2, kind: input, shape index: {}]
  %s3 = inlined_call_operand.vmem [shape: f32[1,32], index: 3, kind: input, shape index: {}]
  %s4 = inlined_call_operand.vmem [shape: f32[1,32], index: 4, kind: input, shape index: {}]
  %s5 = inlined_call_operand.hbm [shape: f32[2,32], index: 5, kind: output, shape index: {0}]
  %s6 = inlined_call_operand.hbm [shape: f32[2,32], index: 6, kind: output, shape index: {1}]
  %7 = xla_tuple %s5, %s6
  %s8 = sld [smem:[#allocation0]]
  $region50: #{tpu_custom_call.1} parent=0
    _
  %s10 = ssub.s32 1, %s8
  %s11 = scalar_select 0, %s10, %s8
  $region1: #{tpu_custom_call.1} parent=0
    #allocation2 [shape = 'u8[512]{0}', space=smem, size = 0x200, scoped, tag = 'input window, operand 0, single buffered']
    #allocation3 [shape = 's32[1]{0}', space=sflag, size = 0x4, scoped, tag = 'scoped memory for tpu_custom_call.1']
    #allocation4 [shape = 's32[1]{0}', space=sflag, size = 0x4, scoped, tag = 'scoped memory for tpu_custom_call.1']
    #allocation5 [shape = 's32[1]{0}', space=sflag, size = 0x4, scoped, tag = 'scoped memory for tpu_custom_call.1']
    #allocation6 [shape = 'u8[1024]{0}', space=vmem, size = 0x400, scoped, tag = 'input window, operand 1, single buffered']
    #allocation7 [shape = 'u8[1024]{0}', space=vmem, size = 0x400, scoped, tag = 'input window, operand 2, single buffered']
    #allocation8 [shape = 's32[1]{0}', space=sflag, size = 0x4, scoped, tag = 'scoped memory for tpu_custom_call.1']
    #allocation9 [shape = 'u8[1024]{0}', space=vmem, size = 0x400, scoped, tag = 'output window, operand 0, single buffered']
    #allocation10 [shape = 'u8[1024]{0}', space=vmem, size = 0x400, scoped, tag = 'output window, operand 1, single buffered']
    #allocation11 [shape = 's32[1]{0}', space=sflag, size = 0x4, scoped, tag = 'scoped memory for tpu_custom_call.1']
    %12 = vsyncpa [#allocation5], 0
    %13 = vsyncpa [#allocation3], 0
    %14 = vsyncpa [#allocation8], 0
    %15 = vsyncpa [#allocation4], 0
    %16 = vsyncpa [#allocation11], 0
    // Predicated region
    $region2: #{tpu_custom_call.1} parent=1 // pred_check
      _
    $region3: #{tpu_custom_call.1} parent=1 // pred_check_branch
      %18 = sbr.rel (0) target = $region5
    $region4: #{tpu_custom_call.1} parent=1 // pred_region
      %20 = vsyncadd [#allocation5], 0
      %s22 = sshll.u32 %s0, 4
      %s23 = int_to_ptr.hbm [resolvable:$true] %s22
      %25 = dma.hbm_to_smem %s23, 16, [#allocation2], [#allocation5]
    $region5: #{tpu_custom_call.1} parent=1 // pred_fallthru
      _
    // Predicated region
    $region6: #{tpu_custom_call.1} parent=1 // pred_check
      _
    $region7: #{tpu_custom_call.1} parent=1 // pred_check_branch
      %27 = sbr.rel (0) target = $region9
    $region8: #{tpu_custom_call.1} parent=1 // pred_region
      %29 = vsyncadd [#allocation3], 0
      %s31 = sshll.u32 %s1, 4
      %s32 = int_to_ptr.hbm [resolvable:$true] %s31
      %s33 = sshll.u32 [#allocation6], 4
      %s34 = int_to_ptr.vmem [resolvable:$true] %s33
      %36 = dma.hbm_to_vmem [thread:$0]  %s32, 32, %s34, [#allocation3]
    $region9: #{tpu_custom_call.1} parent=1 // pred_fallthru
      _
    // Predicated region
    $region10: #{tpu_custom_call.1} parent=1 // pred_check
      _
    $region11: #{tpu_custom_call.1} parent=1 // pred_check_branch
      %38 = sbr.rel (0) target = $region13
    $region12: #{tpu_custom_call.1} parent=1 // pred_region
      %40 = vsyncadd [#allocation8], 0
      %s42 = sshll.u32 %s2, 4
      %s43 = int_to_ptr.hbm [resolvable:$true] %s42
      %s44 = sshll.u32 [#allocation7], 4
      %s45 = int_to_ptr.vmem [resolvable:$true] %s44
      %47 = dma.hbm_to_vmem [thread:$0]  %s43, 32, %s45, [#allocation8]
    $region13: #{tpu_custom_call.1} parent=1 // pred_fallthru
      _
    // Predicated region
    $region14: #{tpu_custom_call.1} parent=1 // pred_check
      _
    $region15: #{tpu_custom_call.1} parent=1 // pred_check_branch
      %49 = sbr.rel (0) target = $region17
    $region16: #{tpu_custom_call.1} parent=1 // pred_region
      _
    $region17: #{tpu_custom_call.1} parent=1 // pred_fallthru
      _
    // Predicated region
    $region18: #{tpu_custom_call.1} parent=1 // pred_check
      _
    $region19: #{tpu_custom_call.1} parent=1 // pred_check_branch
      %51 = sbr.rel (0) target = $region21
    $region20: #{tpu_custom_call.1} parent=1 // pred_region
      _
    $region21: #{tpu_custom_call.1} parent=1 // pred_fallthru
      _
    // Predicated region
    $region22: #{tpu_custom_call.1} parent=1 // pred_check
      _
    $region23: #{tpu_custom_call.1} parent=1 // pred_check_branch
      %53 = sbr.rel (0) target = $region25
    $region24: #{tpu_custom_call.1} parent=1 // pred_region
      %55 = dma.done [#allocation5], 16
    $region25: #{tpu_custom_call.1} parent=1 // pred_fallthru
      _
    // Predicated region
    $region26: #{tpu_custom_call.1} parent=1 // pred_check
      _
    $region27: #{tpu_custom_call.1} parent=1 // pred_check_branch
      %57 = sbr.rel (0) target = $region29
    $region28: #{tpu_custom_call.1} parent=1 // pred_region
      %59 = dma.done [#allocation3], 32
    $region29: #{tpu_custom_call.1} parent=1 // pred_fallthru
      _
    // Predicated region
    $region30: #{tpu_custom_call.1} parent=1 // pred_check
      _
    $region31: #{tpu_custom_call.1} parent=1 // pred_check_branch
      %61 = sbr.rel (0) target = $region33
    $region32: #{tpu_custom_call.1} parent=1 // pred_region
      %63 = dma.done [#allocation8], 32
    $region33: #{tpu_custom_call.1} parent=1 // pred_fallthru
      _
    %64 = sfence
    %s65 = sld [smem:[#allocation2]]
    %s66 = sld [smem:[#allocation2 + $0x1]]
    %v67 = vld [vmem:[#allocation6] sm:$0x3]
    %v68 = vstv %s65
    %v69 = vmul.f32 %v67, %v68
    %v70 = vstv %s66
    %v71 = vadd.f32 %v69, %v70
    %vm72 = vcmask 58368
    %v73 = vsel %vm72, %v71, -inf
    %74 = vmax.xlane.f32.xlu0 %v73
    %v75 = vpop.xlane.xlu0 %74
    %v76 = vsub.f32 %v71, %v75
    %v77 = vmul.f32 %v76, 1.442695
    %v78 = vpow.pop %v77
    %v79 = vsel %vm72, %v78, 0.0
    %80 = vadd.xlane.f32.xlu0 %v79
    %v81 = vpop.xlane.xlu0 %80
    %v82 = vmul.f32 %v67, %v78
    %v83 = vsel %vm72, %v82, 0.0
    %84 = vadd.xlane.f32.xlu0 %v83
    %v85 = vpop.xlane.xlu0 %84
    %v86 = vrcp.pop %v81
    %v87 = vmul.f32 %v81, %v86
    %v88 = vsub.f32 1.0, %v87
    %v89 = vmul.f32 %v86, %v88
    %v90 = vadd.f32 %v86, %v89
    %vm91 = vweird.f32 %v81
    %vm92 = vweird.f32 %v86
    %vm93 = vmor %vm91, %vm92
    %v94 = vsel %vm93, %v86, %v90
    %v95 = vand.u32 2147483647, %v81
    %vm96 = vcmp.eq.f32.partialorder %v95, 8.507059e+37
    %v97 = vand.u32 %v81, 2147483648
    %v98 = vor.u32 1.1754944e-38, %v97
    %v99 = vsel %vm96, %v98, %v94
    %v100 = vmul.f32 %v85, %v99
    %v101 = vld [vmem:[%s3] sm:$0x1]
    %v103 = vperm.slane %v101, 0
    %v105 = vmul.f32 %v100, %v103
    %vm106 = vcmask 254976
    %107 = vst.msk [vmem:[#allocation9] sm:$0x3] %vm106, %v105
    %s108 = sld [smem:[#allocation2 + $0x2]]
    %s109 = sld [smem:[#allocation2 + $0x3]]
    %v110 = vld [vmem:[#allocation7] sm:$0x3]
    %v111 = vstv %s108
    %v112 = vmul.f32 %v110, %v111
    %v113 = vstv %s109
    %v114 = vadd.f32 %v112, %v113
    %v115 = vsel %vm72, %v114, -inf
    %116 = vmax.xlane.f32.xlu0 %v115
    %v117 = vpop.xlane.xlu0 %116
    %v118 = vsub.f32 %v114, %v117
    %v119 = vmul.f32 %v118, 1.442695
    %v120 = vpow.pop %v119
    %v121 = vsel %vm72, %v120, 0.0
    %122 = vadd.xlane.f32.xlu0 %v121
    %v123 = vpop.xlane.xlu0 %122
    %v124 = vmul.f32 %v110, %v120
    %v125 = vsel %vm72, %v124, 0.0
    %126 = vadd.xlane.f32.xlu0 %v125
    %v127 = vpop.xlane.xlu0 %126
    %v128 = vrcp.pop %v123
    %v129 = vmul.f32 %v123, %v128
    %v130 = vsub.f32 1.0, %v129
    %v131 = vmul.f32 %v128, %v130
    %v132 = vadd.f32 %v128, %v131
    %vm133 = vweird.f32 %v123
    %vm134 = vweird.f32 %v128
    %vm135 = vmor %vm133, %vm134
    %v136 = vsel %vm135, %v128, %v132
    %v137 = vand.u32 2147483647, %v123
    %vm138 = vcmp.eq.f32.partialorder %v137, 8.507059e+37
    %v139 = vand.u32 %v123, 2147483648
    %v140 = vor.u32 1.1754944e-38, %v139
    %v141 = vsel %vm138, %v140, %v136
    %v142 = vmul.f32 %v127, %v141
    %v143 = vld [vmem:[%s4] sm:$0x1]
    %v145 = vperm.slane %v143, 0
    %v147 = vmul.f32 %v142, %v145
    %148 = vst.msk [vmem:[#allocation10] sm:$0x3] %vm106, %v147
    // Predicated region
    $region34: #{tpu_custom_call.1} parent=1 // pred_check
      _
    $region35: #{tpu_custom_call.1} parent=1 // pred_check_branch
      %150 = sbr.rel (0) target = $region37
    $region36: #{tpu_custom_call.1} parent=1 // pred_region
      %152 = vsyncadd [#allocation4], 0
      %s154 = sshll.u32 [#allocation9], 4
      %s155 = int_to_ptr.vmem [resolvable:$true] %s154
      %s156 = sshll.u32 %s5, 4
      %s157 = int_to_ptr.hbm [resolvable:$true] %s156
      %159 = dma.vmem_to_hbm [thread:$0]  %s155, 32, %s157, [#allocation4]
    $region37: #{tpu_custom_call.1} parent=1 // pred_fallthru
      _
    // Predicated region
    $region38: #{tpu_custom_call.1} parent=1 // pred_check
      _
    $region39: #{tpu_custom_call.1} parent=1 // pred_check_branch
      %161 = sbr.rel (0) target = $region41
    $region40: #{tpu_custom_call.1} parent=1 // pred_region
      %163 = vsyncadd [#allocation11], 0
      %s165 = sshll.u32 [#allocation10], 4
      %s166 = int_to_ptr.vmem [resolvable:$true] %s165
      %s167 = sshll.u32 %s6, 4
      %s168 = int_to_ptr.hbm [resolvable:$true] %s167
      %170 = dma.vmem_to_hbm [thread:$0]  %s166, 32, %s168, [#allocation11]
    $region41: #{tpu_custom_call.1} parent=1 // pred_fallthru
      _
    // Predicated region
    $region42: #{tpu_custom_call.1} parent=1 // pred_check
      _
    $region43: #{tpu_custom_call.1} parent=1 // pred_check_branch
      %172 = sbr.rel (0) target = $region45
    $region44: #{tpu_custom_call.1} parent=1 // pred_region
      %174 = dma.done [#allocation4], 32
    $region45: #{tpu_custom_call.1} parent=1 // pred_fallthru
      _
    // Predicated region
    $region46: #{tpu_custom_call.1} parent=1 // pred_check
      _
    $region47: #{tpu_custom_call.1} parent=1 // pred_check_branch
      %176 = sbr.rel (0) target = $region49
    $region48: #{tpu_custom_call.1} parent=1 // pred_region
      %178 = dma.done [#allocation11], 32
    $region49: #{tpu_custom_call.1} parent=1 // pred_fallthru
      _
    %179 = vsyncpa [#allocation3], 1
    %180 = vsyncpa [#allocation8], 1
    %181 = vsyncpa [#allocation4], 1
    %182 = vsyncpa [#allocation11], 1
    %183 = vsyncpa [#allocation5], 1

</llo_original>
